<compile_context>
chip_gen: v7x
topology: tpu7x:2x2x1
jax: 0.10.0
libtpu: 0.0.40
codegen_flags: <defaults>
</compile_context>

<pallas_src>
import functools
import math

import jax
import jax.numpy as jnp
from jax.experimental import pallas as pl
from jax.experimental.pallas import tpu as pltpu


def _make_sdpa_kernel(inv_scaler, *, has_mask, scale_score, norm_p, fast_math):
    """Build a kernel specialized on static configuration.

    scale_score: apply 1/sqrt(d_k) to the (S,S) score instead of to q (S,D).
    norm_p:      normalize p (S,S) before the PV matmul instead of scaling c (S,D).
    fast_math:   bf16 MXU operands + EUP approx reciprocal (elementwise stays f32).
    """
    mxu_dtype = jnp.bfloat16 if fast_math else jnp.float32

    def kernel(*refs):
        if has_mask:
            q_ref, k_ref, v_ref, mask_ref, o_ref = refs
        else:
            q_ref, k_ref, v_ref, o_ref = refs

        q = q_ref[...]                                    # (TB, S, D) f32
        if not scale_score:
            q = q * inv_scaler                            # fold scale into q
        # score[b, i, j] = sum_d q[b, i, d] * k[b, j, d]  (batched "NT" matmul)
        score = jnp.einsum(
            "bqd,bkd->bqk",
            q.astype(mxu_dtype),
            k_ref[...].astype(mxu_dtype),
            preferred_element_type=jnp.float32,
        )                                                 # (TB, S, S) f32
        if scale_score:
            score = score * inv_scaler
        # Row max is computed BEFORE masking (matches the PyTorch module).
        score = score - jnp.max(score, axis=-1, keepdims=True)
        if has_mask:
            m = mask_ref[...]                             # (TB, 1, S) int32
            # exp(-inf) == 0 reproduces masked_fill_(mask, 0) exactly.
            score = jnp.where(m != 0, -jnp.inf, score)
        p = jnp.exp(score)                                # (TB, S, S) f32
        row_sum = jnp.sum(p, axis=-1, keepdims=True)      # (TB, S, 1)
        inv_sum = pl.reciprocal(row_sum, approx=fast_math)

        if norm_p:
            p = p * inv_sum                               # normalize (S,S) side
        c = jnp.einsum(
            "bqk,bkd->bqd",
            p.astype(mxu_dtype),
            v_ref[...].astype(mxu_dtype),
            preferred_element_type=jnp.float32,
        )                                                 # (TB, S, D) f32
        if not norm_p:
            c = c * inv_sum                               # normalize (S,D) side
        o_ref[...] = c.astype(o_ref.dtype)

    return kernel


def _vmem_config():
    """Generation-aware VMEM limit and tile-selection budget."""
    phys = 128 * 1024 * 1024                      # v5e / v6e default
    try:
        info = pltpu.get_tpu_info()
        phys = int(getattr(info, "vmem_capacity_bytes", phys))
    except Exception:
        pass
    # <= ~48 MiB on v7x (64 MiB/TC), 64 MiB on v5e/v6e (128 MiB), with headroom.
    limit = min(phys * 3 // 4, 64 * 1024 * 1024)
    budget = limit // 2
    return limit, budget


def _choose_batch_tile(B, S, D, vmem_budget_bytes):
    """Largest divisor of B whose per-step footprint fits the budget while
    keeping >= 2 grid steps (pipelining + v7x megacore) whenever B allows."""

    def tile_bytes(tb):
        qkvo = 4 * tb * S * D * 4 * 2              # q,k,v,out f32, double-buffered
        msk = tb * S * 4 * 2                       # mask block
        sxs = 3 * tb * S * S * 4                   # score / p / select f32 temps
        bf16 = (3 * tb * S * D + tb * S * S) * 2   # bf16 MXU operand copies
        return qkvo + msk + sxs + bf16

    best = 1
    for tb in range(1, B + 1):
        if B % tb:
            continue
        if tile_bytes(tb) > vmem_budget_bytes:
            continue
        if B >= 2 and B // tb < 2:
            continue                               # keep the pipeline >= 2 deep
        best = tb
    return best


def scaled_dot_product_attention(q, k, v, mask=None, *, fast_math=True):
    """q, k, v: (B, S, D) float32.  mask: (B, S) bool-like (True = masked) or None."""
    B, S, D = q.shape
    inv_scaler = 1.0 / math.sqrt(D)
    has_mask = mask is not None

    vmem_limit, vmem_budget = _vmem_config()
    TB = _choose_batch_tile(B, S, D, vmem_budget)

    small_side_is_score = S < D   # (S,S) is cheaper to touch than (S,D)
    kernel = _make_sdpa_kernel(
        inv_scaler,
        has_mask=has_mask,
        scale_score=small_side_is_score,
        norm_p=small_side_is_score,
        fast_math=fast_math,
    )

    qkv_spec = pl.BlockSpec((TB, S, D), lambda b: (b, 0, 0))
    in_specs = [qkv_spec, qkv_spec, qkv_spec]
    args = [q, k, v]
    if has_mask:
        mask_i32 = mask.astype(jnp.int32).reshape(B, 1, S)
        in_specs.append(pl.BlockSpec((TB, 1, S), lambda b: (b, 0, 0)))
        args.append(mask_i32)

    # TODO(synk): for S >= ~512 switch to a flash-style grid (B, S//TQ, S//TK)
    # with an online softmax + VMEM accumulator so the (S,S) score never
    # materializes; also pad the key axis to 128 lanes in-kernel when S % 128 != 0.
    return pl.pallas_call(
        kernel,
        out_shape=jax.ShapeDtypeStruct((B, S, D), q.dtype),
        grid_spec=pltpu.PrefetchScalarGridSpec(
            num_scalar_prefetch=0,
            grid=(pl.cdiv(B, TB),),
            in_specs=in_specs,
            out_specs=pl.BlockSpec((TB, S, D), lambda b: (b, 0, 0)),
        ),
        compiler_params=pltpu.CompilerParams(
            dimension_semantics=("parallel",),
            vmem_limit_bytes=int(vmem_limit),
        ),
    )(*args)


def _reference(q, k, v, mask=None):
    """Pure-JAX reference mirroring the PyTorch forward exactly."""
    d_k = q.shape[-1]
    scaler = jnp.sqrt(jnp.float32(d_k))
    score = jnp.einsum("ijk,ilk->ijl", q, k) / scaler
    score = score - jnp.max(score, axis=-1, keepdims=True)
    score = jnp.exp(score)
    if mask is not None:
        m = jnp.broadcast_to(mask[:, None, :], score.shape)
        score = jnp.where(m, 0.0, score)
    a = score / jnp.sum(score, axis=-1, keepdims=True)
    return jnp.einsum("ijk,ikl->ijl", a, v)


if __name__ == "__main__":
    B, S, D = 2, 8, 32  # batch, sequence, out_features (d_k)
    key = jax.random.PRNGKey(0)
    kq, kk, kv, km = jax.random.split(key, 4)

    q = jax.random.normal(kq, (B, S, D), dtype=jnp.float32)
    k = jax.random.normal(kk, (B, S, D), dtype=jnp.float32)
    v = jax.random.normal(kv, (B, S, D), dtype=jnp.float32)
    # Boolean mask (True = masked); ensure at least one unmasked key per row
    # (a fully-masked row divides by zero, same as the PyTorch module).
    mask = jax.random.bernoulli(km, p=0.3, shape=(B, S))
    mask = mask.at[:, 0].set(False)

    ref = _reference(q, k, v, mask)
    ref_nomask = _reference(q, k, v, None)

    # Fast path (bf16 MXU + approx reciprocal): loose tolerance.
    out = jax.block_until_ready(scaled_dot_product_attention(q, k, v, mask))
    assert out.shape == (B, S, D)
    assert jnp.allclose(out, ref, atol=2e-2, rtol=2e-2), "fast masked mismatch"

    out_nomask = jax.block_until_ready(scaled_dot_product_attention(q, k, v, None))
    assert jnp.allclose(out_nomask, ref_nomask, atol=2e-2, rtol=2e-2), \
        "fast unmasked mismatch"

    # Precise path (f32 MXU, exact reciprocal): tight tolerance.
    out_exact = jax.block_until_ready(
        scaled_dot_product_attention(q, k, v, mask, fast_math=False))
    assert jnp.allclose(out_exact, ref, atol=1e-5, rtol=1e-5), \
        "precise masked mismatch"

    print("KERNEL_OK")
</pallas_src>

<mosaic_0001>
module attributes {stable_mosaic.version = 11 : i64} {
  func.func @kernel(%arg0: i32, %arg1: memref<1x8x32xf32, #tpu.memory_space<vmem>>, %arg2: memref<1x8x32xf32, #tpu.memory_space<vmem>>, %arg3: memref<1x8x32xf32, #tpu.memory_space<vmem>>, %arg4: memref<1x1x8xi32, #tpu.memory_space<vmem>>, %arg5: memref<1x8x32xf32, #tpu.memory_space<vmem>>) attributes {dimension_semantics = [#tpu.dimension_semantics<parallel>], iteration_bounds = array<i64: 2>, scalar_prefetch = 0 : i64, scratch_operands = 0 : i64, tpu.core_type = #tpu.core_type<tc>, window_params = [{transform_indices = @transform_0, window_bounds = array<i64: 1, 8, 32>}, {transform_indices = @transform_1, window_bounds = array<i64: 1, 8, 32>}, {transform_indices = @transform_2, window_bounds = array<i64: 1, 8, 32>}, {transform_indices = @transform_3, window_bounds = array<i64: 1, 1, 8>}, {transform_indices = @transform_4, window_bounds = array<i64: 1, 8, 32>}]} {
    %c0 = arith.constant 0 : index
    %c0_0 = arith.constant 0 : index
    %c0_1 = arith.constant 0 : index
    %0 = vector.load %arg1[%c0, %c0_0, %c0_1] : memref<1x8x32xf32, #tpu.memory_space<vmem>>, vector<1x8x32xf32>
    %1 = arith.truncf %0 : vector<1x8x32xf32> to vector<1x8x32xbf16>
    %c0_2 = arith.constant 0 : index
    %c0_3 = arith.constant 0 : index
    %c0_4 = arith.constant 0 : index
    %2 = vector.load %arg2[%c0_2, %c0_3, %c0_4] : memref<1x8x32xf32, #tpu.memory_space<vmem>>, vector<1x8x32xf32>
    %3 = arith.truncf %2 : vector<1x8x32xf32> to vector<1x8x32xbf16>
    "tpu.trace_start"() <{level = 10 : i32, message = "bqd,bkd->bqk"}> : () -> ()
    %cst = arith.constant dense<0.000000e+00> : vector<1x8x8xf32>
    %4 = tpu.matmul %1, %3, %cst {dimension_numbers = #tpu.dot_dimension_numbers<[2], [2], [1], [1], [0, 0, 0, 1, 1, 1], [0], [0]>} : vector<1x8x32xbf16>, vector<1x8x32xbf16>, vector<1x8x8xf32> -> vector<1x8x8xf32>
    "tpu.trace_stop"() : () -> ()
    %cst_5 = arith.constant 0.176776692 : f32
    %5 = vector.broadcast %cst_5 : f32 to vector<1x8x8xf32>
    %6 = arith.mulf %4, %5 : vector<1x8x8xf32>
    %cst_6 = arith.constant dense<0xFF800000> : vector<1x8xf32>
    %7 = vector.multi_reduction <maximumf>, %6, %cst_6 [2] : vector<1x8x8xf32> to vector<1x8xf32>
    %8 = vector.shape_cast %7 : vector<1x8xf32> to vector<1x8x1xf32>
    %9 = vector.broadcast %8 : vector<1x8x1xf32> to vector<1x8x8xf32>
    %10 = arith.subf %6, %9 : vector<1x8x8xf32>
    %c0_7 = arith.constant 0 : index
    %c0_8 = arith.constant 0 : index
    %c0_9 = arith.constant 0 : index
    %11 = vector.load %arg4[%c0_7, %c0_8, %c0_9] : memref<1x1x8xi32, #tpu.memory_space<vmem>>, vector<1x1x8xi32>
    %c0_i32 = arith.constant 0 : i32
    %12 = vector.broadcast %c0_i32 : i32 to vector<1x1x8xi32>
    %13 = arith.cmpi ne, %11, %12 : vector<1x1x8xi32>
    %cst_10 = arith.constant 0xFF800000 : f32
    %14 = vector.shape_cast %13 : vector<1x1x8xi1> to vector<1x1x8xi1>
    %15 = vector.broadcast %14 : vector<1x1x8xi1> to vector<1x8x8xi1>
    %16 = vector.broadcast %cst_10 : f32 to vector<1x8x8xf32>
    %17 = arith.select %15, %16, %10 : vector<1x8x8xi1>, vector<1x8x8xf32>
    %18 = math.exp %17 : vector<1x8x8xf32>
    %cst_11 = arith.constant dense<0.000000e+00> : vector<1x8xf32>
    %19 = vector.multi_reduction <add>, %18, %cst_11 [2] : vector<1x8x8xf32> to vector<1x8xf32>
    %20 = vector.shape_cast %19 : vector<1x8xf32> to vector<1x8x1xf32>
    %21 = tpu.reciprocal %20 {approx = true} : vector<1x8x1xf32> -> vector<1x8x1xf32>
    %22 = vector.broadcast %21 : vector<1x8x1xf32> to vector<1x8x8xf32>
    %23 = arith.mulf %18, %22 : vector<1x8x8xf32>
    %24 = arith.truncf %23 : vector<1x8x8xf32> to vector<1x8x8xbf16>
    %c0_12 = arith.constant 0 : index
    %c0_13 = arith.constant 0 : index
    %c0_14 = arith.constant 0 : index
    %25 = vector.load %arg3[%c0_12, %c0_13, %c0_14] : memref<1x8x32xf32, #tpu.memory_space<vmem>>, vector<1x8x32xf32>
    %26 = arith.truncf %25 : vector<1x8x32xf32> to vector<1x8x32xbf16>
    "tpu.trace_start"() <{level = 10 : i32, message = "bqk,bkd->bqd"}> : () -> ()
    %cst_15 = arith.constant dense<0.000000e+00> : vector<1x8x32xf32>
    %27 = tpu.matmul %24, %26, %cst_15 {dimension_numbers = #tpu.dot_dimension_numbers<[2], [1], [1], [2], [0, 0, 0, 1, 1, 2], [0], [0]>} : vector<1x8x8xbf16>, vector<1x8x32xbf16>, vector<1x8x32xf32> -> vector<1x8x32xf32>
    "tpu.trace_stop"() : () -> ()
    %c0_16 = arith.constant 0 : index
    %c0_17 = arith.constant 0 : index
    %c0_18 = arith.constant 0 : index
    %28 = vector.load %arg5[%c0_16, %c0_17, %c0_18] : memref<1x8x32xf32, #tpu.memory_space<vmem>>, vector<1x8x32xf32>
    tpu.vector_store %arg5[%c0_16, %c0_17, %c0_18], %27 {strides = array<i32>} : memref<1x8x32xf32, #tpu.memory_space<vmem>>, vector<1x8x32xf32>,
    return
  }
  func.func @transform_0(%arg0: i32) -> (i32, i32, i32) {
    %c0_i32 = arith.constant 0 : i32
    %c0_i32_0 = arith.constant 0 : i32
    %c0_i32_1 = arith.constant 0 : i32
    return %arg0, %c0_i32, %c0_i32_0 : i32, i32, i32
  }
  func.func @transform_1(%arg0: i32) -> (i32, i32, i32) {
    %c0_i32 = arith.constant 0 : i32
    %c0_i32_0 = arith.constant 0 : i32
    %c0_i32_1 = arith.constant 0 : i32
    return %arg0, %c0_i32, %c0_i32_0 : i32, i32, i32
  }
  func.func @transform_2(%arg0: i32) -> (i32, i32, i32) {
    %c0_i32 = arith.constant 0 : i32
    %c0_i32_0 = arith.constant 0 : i32
    %c0_i32_1 = arith.constant 0 : i32
    return %arg0, %c0_i32, %c0_i32_0 : i32, i32, i32
  }
  func.func @transform_3(%arg0: i32) -> (i32, i32, i32) {
    %c0_i32 = arith.constant 0 : i32
    %c0_i32_0 = arith.constant 0 : i32
    %c0_i32_1 = arith.constant 0 : i32
    return %arg0, %c0_i32, %c0_i32_0 : i32, i32, i32
  }
  func.func @transform_4(%arg0: i32) -> (i32, i32, i32) {
    %c0_i32 = arith.constant 0 : i32
    %c0_i32_0 = arith.constant 0 : i32
    %c0_i32_1 = arith.constant 0 : i32
    return %arg0, %c0_i32, %c0_i32_0 : i32, i32, i32
  }
}

</mosaic_0001>

<llo_original>
// kernel: tpu_custom_call.1
$region0: #{tpu_custom_call.1}
  #allocation0 [shape = 'u32[]', space=smem, size = 0x4, offset = 0x4, fixed_abs, tag = 'smem constant byte address 0x4 - core index']
  #allocation1 [shape = 'u32[144,128]{1,0:T(1,128)}', space=vmem, size = 0x12000, scoped, tag = 'internal scratch']
  %s0 = inlined_call_operand.hbm [shape: f32[2,8,32], index: 0, kind: input, shape index: {}]
  %s1 = inlined_call_operand.hbm [shape: f32[2,8,32], index: 1, kind: input, shape index: {}]
  %s2 = inlined_call_operand.hbm [shape: f32[2,8,32], index: 2, kind: input, shape index: {}]
  %s3 = inlined_call_operand.hbm [shape: s32[2,1,8], index: 3, kind: input, shape index: {}]
  %s4 = inlined_call_operand.hbm [shape: f32[2,8,32], index: 4, kind: output, shape index: {}]
  %s5 = sld [smem:[#allocation0]]
  $region65: #{tpu_custom_call.1} parent=0
    _
  %s7 = ssub.s32 1, %s5
  %s8 = scalar_select 0, %s7, %s5
  $region1: #{tpu_custom_call.1} parent=0
    #allocation2 [shape = 'u8[8192]{0}', space=vmem, size = 0x2000, scoped, tag = 'input window, operand 0']
    #allocation3 [shape = 's32[2]{0}', space=sflag, size = 0x8, scoped, tag = 'scoped memory for tpu_custom_call.1']
    #allocation4 [shape = 's32[2]{0}', space=sflag, size = 0x8, scoped, tag = 'scoped memory for tpu_custom_call.1']
    #allocation5 [shape = 'u8[8192]{0}', space=vmem, size = 0x2000, scoped, tag = 'input window, operand 1']
    #allocation6 [shape = 's32[2]{0}', space=sflag, size = 0x8, scoped, tag = 'scoped memory for tpu_custom_call.1']
    #allocation7 [shape = 'u8[8192]{0}', space=vmem, size = 0x2000, scoped, tag = 'input window, operand 2']
    #allocation8 [shape = 'u8[1024]{0}', space=vmem, size = 0x400, scoped, tag = 'input window, operand 3']
    #allocation9 [shape = 's32[2]{0}', space=sflag, size = 0x8, scoped, tag = 'scoped memory for tpu_custom_call.1']
    #allocation10 [shape = 'u8[8192]{0}', space=vmem, size = 0x2000, scoped, tag = 'output window, operand 0']
    %9 = vsyncpa [#allocation3], 0
    %s10 = scalar_lea.sflag [#allocation3], 1
    %11 = vsyncpa %s10, 0
    %12 = vsyncpa [#allocation6], 0
    %s13 = scalar_lea.sflag [#allocation6], 1
    %14 = vsyncpa %s13, 0
    %15 = vsyncpa [#allocation9], 0
    %s16 = scalar_lea.sflag [#allocation9], 1
    %17 = vsyncpa %s16, 0
    %18 = vsyncpa [#allocation4], 0
    %s19 = scalar_lea.sflag [#allocation4], 1
    %20 = vsyncpa %s19, 0
    loop: start=0, step=1, limit=4
    $region2: #{tpu_custom_call.1} parent=1 // loop_pre_header
      _
    $region3: #{tpu_custom_call.1} parent=1 // loop_header
      %s22 = sphi 0, %s26
      %p23 = scmp.ge.s32.totalorder %s22, 4
      %s32 = sphi 0, %s34
      %s35 = sphi 0, %s32
      %s36 = sphi 0, %s35
      %s52 = sphi 0, %s36
      %s58 = sphi 0, %s60
      %s61 = sphi 0, %s58
      %s62 = sphi 0, %s61
      %s78 = sphi 0, %s62
      %s84 = sphi 0, %s86
      %s87 = sphi 0, %s84
      %s88 = sphi 0, %s87
      %s104 = sphi 0, %s88
      %s110 = sphi 0, %s112
      %s113 = sphi 0, %s110
      %s114 = sphi 0, %s113
      %s130 = sphi 0, %s114
      %s136 = sphi 0, %s138
      %s139 = sphi 0, %s136
      %s140 = sphi 0, %s139
      %s156 = sphi 0, %s140
    $region4: #{tpu_custom_call.1} parent=1 // loop_header_branch
      %25 = sbr.rel (%p23) target = $region8
    $region5: #{tpu_custom_call.1} parent=1 // loop_body
      %s27 = ssub.s32 %s22, 1
      %s28 = ssub.s32 %s22, 2
      %s29 = sadd.s32 %s22, 1
      %s30 = ssub.s32 %s22, %s29
      %p31 = scmp.eq.s32.totalorder %s30, 0
      %s33 = sadd.s32 %s32, 1
      %s34 = scalar_select %p31, %s32, %s33
      %p37 = pneg %p31
      %p38 = scmp.eq.s32.totalorder %s22, 1
      %p39 = por %p37, %p38
      %p40 = scmp.ne.s32.totalorder %s32, %s35
      %p41 = scmp.eq.s32.totalorder %s22, 0
      %p42 = por %p40, %p41
      %p43 = scmp.ne.s32.totalorder %s32, %s35
      %p44 = scmp.eq.s32.totalorder %s27, 1
      %p45 = por %p43, %p44
      %p46 = scmp.ne.s32.totalorder %s35, %s36
      %p47 = scmp.eq.s32.totalorder %s27, 0
      %p48 = por %p46, %p47
      %p49 = scmp.ne.s32.totalorder %s35, %s36
      %p50 = scmp.eq.s32.totalorder %s28, 1
      %p51 = por %p49, %p50
      %p53 = scmp.ne.s32.totalorder %s36, %s52
      %p54 = scmp.eq.s32.totalorder %s28, 0
      %p55 = por %p53, %p54
      %s56 = ssub.s32 %s22, %s29
      %p57 = scmp.eq.s32.totalorder %s56, 0
      %s59 = sadd.s32 %s58, 1
      %s60 = scalar_select %p57, %s58, %s59
      %p63 = pneg %p57
      %p64 = scmp.eq.s32.totalorder %s22, 1
      %p65 = por %p63, %p64
      %p66 = scmp.ne.s32.totalorder %s58, %s61
      %p67 = scmp.eq.s32.totalorder %s22, 0
      %p68 = por %p66, %p67
      %p69 = scmp.ne.s32.totalorder %s58, %s61
      %p70 = scmp.eq.s32.totalorder %s27, 1
      %p71 = por %p69, %p70
      %p72 = scmp.ne.s32.totalorder %s61, %s62
      %p73 = scmp.eq.s32.totalorder %s27, 0
      %p74 = por %p72, %p73
      %p75 = scmp.ne.s32.totalorder %s61, %s62
      %p76 = scmp.eq.s32.totalorder %s28, 1
      %p77 = por %p75, %p76
      %p79 = scmp.ne.s32.totalorder %s62, %s78
      %p80 = scmp.eq.s32.totalorder %s28, 0
      %p81 = por %p79, %p80
      %s82 = ssub.s32 %s22, %s29
      %p83 = scmp.eq.s32.totalorder %s82, 0
      %s85 = sadd.s32 %s84, 1
      %s86 = scalar_select %p83, %s84, %s85
      %p89 = pneg %p83
      %p90 = scmp.eq.s32.totalorder %s22, 1
      %p91 = por %p89, %p90
      %p92 = scmp.ne.s32.totalorder %s84, %s87
      %p93 = scmp.eq.s32.totalorder %s22, 0
      %p94 = por %p92, %p93
      %p95 = scmp.ne.s32.totalorder %s84, %s87
      %p96 = scmp.eq.s32.totalorder %s27, 1
      %p97 = por %p95, %p96
      %p98 = scmp.ne.s32.totalorder %s87, %s88
      %p99 = scmp.eq.s32.totalorder %s27, 0
      %p100 = por %p98, %p99
      %p101 = scmp.ne.s32.totalorder %s87, %s88
      %p102 = scmp.eq.s32.totalorder %s28, 1
      %p103 = por %p101, %p102
      %p105 = scmp.ne.s32.totalorder %s88, %s104
      %p106 = scmp.eq.s32.totalorder %s28, 0
      %p107 = por %p105, %p106
      %s108 = ssub.s32 %s22, %s29
      %p109 = scmp.eq.s32.totalorder %s108, 0
      %s111 = sadd.s32 %s110, 1
      %s112 = scalar_select %p109, %s110, %s111
      %p115 = pneg %p109
      %p116 = scmp.eq.s32.totalorder %s22, 1
      %p117 = por %p115, %p116
      %p118 = scmp.ne.s32.totalorder %s110, %s113
      %p119 = scmp.eq.s32.totalorder %s22, 0
      %p120 = por %p118, %p119
      %p121 = scmp.ne.s32.totalorder %s110, %s113
      %p122 = scmp.eq.s32.totalorder %s27, 1
      %p123 = por %p121, %p122
      %p124 = scmp.ne.s32.totalorder %s113, %s114
      %p125 = scmp.eq.s32.totalorder %s27, 0
      %p126 = por %p124, %p125
      %p127 = scmp.ne.s32.totalorder %s113, %s114
      %p128 = scmp.eq.s32.totalorder %s28, 1
      %p129 = por %p127, %p128
      %p131 = scmp.ne.s32.totalorder %s114, %s130
      %p132 = scmp.eq.s32.totalorder %s28, 0
      %p133 = por %p131, %p132
      %s134 = ssub.s32 %s22, %s29
      %p135 = scmp.eq.s32.totalorder %s134, 0
      %s137 = sadd.s32 %s136, 1
      %s138 = scalar_select %p135, %s136, %s137
      %p141 = pneg %p135
      %p142 = scmp.eq.s32.totalorder %s22, 1
      %p143 = por %p141, %p142
      %p144 = scmp.ne.s32.totalorder %s136, %s139
      %p145 = scmp.eq.s32.totalorder %s22, 0
      %p146 = por %p144, %p145
      %p147 = scmp.ne.s32.totalorder %s136, %s139
      %p148 = scmp.eq.s32.totalorder %s27, 1
      %p149 = por %p147, %p148
      %p150 = scmp.ne.s32.totalorder %s139, %s140
      %p151 = scmp.eq.s32.totalorder %s27, 0
      %p152 = por %p150, %p151
      %p153 = scmp.ne.s32.totalorder %s139, %s140
      %p154 = scmp.eq.s32.totalorder %s28, 1
      %p155 = por %p153, %p154
      %p157 = scmp.ne.s32.totalorder %s140, %s156
      %p158 = scmp.eq.s32.totalorder %s28, 0
      %p159 = por %p157, %p158
      %p160 = scmp.le.s32.totalorder 1, %s22
      %p161 = scmp.lt.s32.totalorder %s22, 3
      %p162 = pnand %p160, %p161
      %p163 = pneg %p162
      // Predicated region
      $region9: #{tpu_custom_call.1} parent=5 // pred_check
        _
      $region10: #{tpu_custom_call.1} parent=5 // pred_check_branch
        %165 = sbr.rel (%p162) target = $region12
      $region11: #{tpu_custom_call.1} parent=5 // pred_region
        %s166 = ssub.s32 %s22, 1
      $region12: #{tpu_custom_call.1} parent=5 // pred_fallthru
        _
      %p167 = scmp.lt.s32.totalorder %s22, 2
      // Predicated region
      $region13: #{tpu_custom_call.1} parent=5 // pred_check
        %p168 = pneg %p167
      $region14: #{tpu_custom_call.1} parent=5 // pred_check_branch
        %170 = sbr.rel (%p168) target = $region16
      $region15: #{tpu_custom_call.1} parent=5 // pred_region
        // Predicated region
        $region17: #{tpu_custom_call.1} parent=15 // pred_check
          %p171 = pneg %p42
        $region18: #{tpu_custom_call.1} parent=15 // pred_check_branch
          %173 = sbr.rel (%p171) target = $region20
        $region19: #{tpu_custom_call.1} parent=15 // pred_region
          %s174 = sand.u32 %s32, 1
          %s175 = scalar_lea.sflag [#allocation3], %s174
          %s176 = sand.u32 %s32, 1
          %s177 = smul.addr %s176, 8
          %s178 = scalar_lea.vmem [#allocation2], %s177
          %s180 = ssub.s32 128, 128
          %181 = vsyncadd %s175, %s180
          %s182 = smul.addr %s22, 128
          %s183 = scalar_lea.hbm %s0, %s182
          %s185 = sshll.u32 %s178, 4
          %s186 = int_to_ptr.vmem [resolvable:$true] %s185
          %188 = dma.hbm_to_vmem [thread:$0]  %s183, 128, %s186, %s175
        $region20: #{tpu_custom_call.1} parent=15 // pred_fallthru
          _
        // Predicated region
        $region21: #{tpu_custom_call.1} parent=15 // pred_check
          %p189 = pneg %p68
        $region22: #{tpu_custom_call.1} parent=15 // pred_check_branch
          %191 = sbr.rel (%p189) target = $region24
        $region23: #{tpu_custom_call.1} parent=15 // pred_region
          %s192 = sand.u32 %s22, 1
          %s193 = scalar_lea.sflag [#allocation6], %s192
          %s194 = sand.u32 %s58, 1
          %s195 = smul.addr %s194, 8
          %s196 = scalar_lea.vmem [#allocation5], %s195
          %s198 = ssub.s32 128, 128
          %199 = vsyncadd %s193, %s198
          %s200 = smul.addr %s22, 128
          %s201 = scalar_lea.hbm %s1, %s200
          %s203 = sshll.u32 %s196, 4
          %s204 = int_to_ptr.vmem [resolvable:$true] %s203
          %206 = dma.hbm_to_vmem [thread:$0]  %s201, 128, %s204, %s193
        $region24: #{tpu_custom_call.1} parent=15 // pred_fallthru
          _
        // Predicated region
        $region25: #{tpu_custom_call.1} parent=15 // pred_check
          %p207 = pneg %p94
        $region26: #{tpu_custom_call.1} parent=15 // pred_check_branch
          %209 = sbr.rel (%p207) target = $region28
        $region27: #{tpu_custom_call.1} parent=15 // pred_region
          %s210 = sand.u32 %s22, 1
          %s211 = scalar_lea.sflag [#allocation6], %s210
          %s212 = sand.u32 %s84, 1
          %s213 = smul.addr %s212, 8
          %s214 = scalar_lea.vmem [#allocation7], %s213
          %s216 = ssub.s32 128, 128
          %217 = vsyncadd %s211, %s216
          %s218 = smul.addr %s22, 128
          %s219 = scalar_lea.hbm %s2, %s218
          %s221 = sshll.u32 %s214, 4
          %s222 = int_to_ptr.vmem [resolvable:$true] %s221
          %224 = dma.hbm_to_vmem [thread:$0]  %s219, 128, %s222, %s211
        $region28: #{tpu_custom_call.1} parent=15 // pred_fallthru
          _
        // Predicated region
        $region29: #{tpu_custom_call.1} parent=15 // pred_check
          %p225 = pneg %p120
        $region30: #{tpu_custom_call.1} parent=15 // pred_check_branch
          %227 = sbr.rel (%p225) target = $region32
        $region31: #{tpu_custom_call.1} parent=15 // pred_region
          %s228 = sand.u32 %s110, 1
          %s229 = scalar_lea.sflag [#allocation9], %s228
          %s230 = sand.u32 %s110, 1
          %s231 = scalar_lea.vmem [#allocation8], %s230
          %s233 = ssub.s32 16, 16
          %234 = vsyncadd %s229, %s233
          %s235 = smul.addr %s22, 16
          %s236 = scalar_lea.hbm %s3, %s235
          %s238 = sshll.u32 %s231, 4
          %s239 = int_to_ptr.vmem [resolvable:$true] %s238
          %241 = dma.hbm_to_vmem [thread:$0]  %s236, 16, %s239, %s229
        $region32: #{tpu_custom_call.1} parent=15 // pred_fallthru
          _
      $region16: #{tpu_custom_call.1} parent=5 // pred_fallthru
        _
      %p242 = scmp.le.s32.totalorder 1, %s22
      %p243 = scmp.lt.s32.totalorder %s22, 3
      %p244 = pnand %p242, %p243
      %p245 = pneg %p244
      // Predicated region
      $region33: #{tpu_custom_call.1} parent=5 // pred_check
        _
      $region34: #{tpu_custom_call.1} parent=5 // pred_check_branch
        %247 = sbr.rel (%p244) target = $region36
      $region35: #{tpu_custom_call.1} parent=5 // pred_region
        %s248 = ssub.s32 %s22, 1
        %s249 = sand.u32 %s35, 1
        %s250 = scalar_lea.sflag [#allocation3], %s249
        %s251 = sand.u32 %s35, 1
        %s252 = smul.addr %s251, 8
        %s253 = scalar_lea.vmem [#allocation2], %s252
        // Predicated region
        $region37: #{tpu_custom_call.1} parent=35 // pred_check
          %p254 = pneg %p48
        $region38: #{tpu_custom_call.1} parent=35 // pred_check_branch
          %256 = sbr.rel (%p254) target = $region40
        $region39: #{tpu_custom_call.1} parent=35 // pred_region
          %257 = dma.done %s250, 128
        $region40: #{tpu_custom_call.1} parent=35 // pred_fallthru
          _
        %s258 = sand.u32 %s27, 1
        %s259 = scalar_lea.sflag [#allocation6], %s258
        %s260 = sand.u32 %s61, 1
        %s261 = smul.addr %s260, 8
        %s262 = scalar_lea.vmem [#allocation5], %s261
        // Predicated region
        $region41: #{tpu_custom_call.1} parent=35 // pred_check
          %p263 = pneg %p74
        $region42: #{tpu_custom_call.1} parent=35 // pred_check_branch
          %265 = sbr.rel (%p263) target = $region44
        $region43: #{tpu_custom_call.1} parent=35 // pred_region
          %266 = dma.done %s259, 128
        $region44: #{tpu_custom_call.1} parent=35 // pred_fallthru
          _
        %s267 = sand.u32 %s27, 1
        %s268 = scalar_lea.sflag [#allocation6], %s267
        %s269 = sand.u32 %s87, 1
        %s270 = smul.addr %s269, 8
        %s271 = scalar_lea.vmem [#allocation7], %s270
        // Predicated region
        $region45: #{tpu_custom_call.1} parent=35 // pred_check
          %p272 = pneg %p100
        $region46: #{tpu_custom_call.1} parent=35 // pred_check_branch
          %274 = sbr.rel (%p272) target = $region48
        $region47: #{tpu_custom_call.1} parent=35 // pred_region
          %275 = dma.done %s268, 128
        $region48: #{tpu_custom_call.1} parent=35 // pred_fallthru
          _
        %s276 = sand.u32 %s113, 1
        %s277 = scalar_lea.sflag [#allocation9], %s276
        %s278 = sand.u32 %s113, 1
        %s279 = scalar_lea.vmem [#allocation8], %s278
        // Predicated region
        $region49: #{tpu_custom_call.1} parent=35 // pred_check
          %p280 = pneg %p126
        $region50: #{tpu_custom_call.1} parent=35 // pred_check_branch
          %282 = sbr.rel (%p280) target = $region52
        $region51: #{tpu_custom_call.1} parent=35 // pred_region
          %283 = dma.done %s277, 16
        $region52: #{tpu_custom_call.1} parent=35 // pred_fallthru
          _
        %s284 = sand.u32 %s35, 1
        %s285 = scalar_lea.sflag [#allocation3], %s284
        %s286 = sand.u32 %s35, 1
        %s287 = smul.addr %s286, 8
        %s288 = scalar_lea.vmem [#allocation2], %s287
        %p289 = pneg %p48
        %p290 = pneg %p45
        %s291 = sand.u32 %s27, 1
        %s292 = scalar_lea.sflag [#allocation6], %s291
        %s293 = sand.u32 %s61, 1
        %s294 = smul.addr %s293, 8
        %s295 = scalar_lea.vmem [#allocation5], %s294
        %p296 = pneg %p74
        %p297 = pneg %p71
        %s298 = sand.u32 %s27, 1
        %s299 = scalar_lea.sflag [#allocation6], %s298
        %s300 = sand.u32 %s87, 1
        %s301 = smul.addr %s300, 8
        %s302 = scalar_lea.vmem [#allocation7], %s301
        %p303 = pneg %p100
        %p304 = pneg %p97
        %s305 = sand.u32 %s113, 1
        %s306 = scalar_lea.sflag [#allocation9], %s305
        %s307 = sand.u32 %s113, 1
        %s308 = scalar_lea.vmem [#allocation8], %s307
        %p309 = pneg %p126
        %p310 = pneg %p123
        %p311 = pneg %p152
        %p312 = pneg %p149
        %s313 = sand.u32 %s139, 1
        %s314 = scalar_lea.sflag [#allocation4], %s313
        %s315 = sand.u32 %s139, 1
        %s316 = smul.addr %s315, 8
        %s317 = scalar_lea.vmem [#allocation10], %s316
        %v319 = vld [vmem:[%s253] sm:$0xff]
        %v320 = vpack.c.bf16 %v319, %v319
        %v321 = vld [vmem:[%s262] sm:$0xff]
        %v322 = vpack.c.bf16 %v321, %v321
        %vm323 = vcmask 261120
        %v325 = vsel %vm323, %v320, 0
        %v328 = vsel %vm323, %v322, 0
        %330 = vmatprep.subr.bf16.mxu0 0
        %331 = vmatpush1.bf16.xpose.msra.mxu0 %v328
        %332 = vmatprep.subr.bf16.mxu0 0
        %333 = vmatpush1.bf16.xpose.msra.mxu0 0
        %334 = vmatprep.subr.bf16.mxu0 0
        %335 = vmatpush1.bf16.xpose.msra.mxu0 0
        %336 = vmatprep.subr.bf16.mxu0 0
        %337 = vmatpush1.bf16.xpose.msra.mxu0 0
        %338 = vmatprep.subr.bf16.mxu0 0
        %339 = vmatpush1.bf16.xpose.msra.mxu0 0
        %340 = vmatprep.subr.bf16.mxu0 0
        %341 = vmatpush1.bf16.xpose.msra.mxu0 0
        %342 = vmatprep.subr.bf16.mxu0 0
        %343 = vmatpush1.bf16.xpose.msra.mxu0 0
        %344 = vmatprep.subr.bf16.mxu0 0
        %345 = vmatpush1.bf16.xpose.msra.mxu0 0
        %346 = vmatprep.subr.bf16.mxu0 0
        %347 = vmatpush1.bf16.xpose.msra.mxu0 0
        %348 = vmatprep.subr.bf16.mxu0 0
        %349 = vmatpush1.bf16.xpose.msra.mxu0 0
        %350 = vmatprep.subr.bf16.mxu0 0
        %351 = vmatpush1.bf16.xpose.msra.mxu0 0
        %352 = vmatprep.subr.bf16.mxu0 0
        %353 = vmatpush1.bf16.xpose.msra.mxu0 0
        %354 = vmatprep.subr.bf16.mxu0 0
        %355 = vmatpush1.bf16.xpose.msra.mxu0 0
        %356 = vmatprep.subr.bf16.mxu0 0
        %357 = vmatpush1.bf16.xpose.msra.mxu0 0
        %358 = vmatprep.subr.bf16.mxu0 0
        %359 = vmatpush1.bf16.xpose.msra.mxu0 0
        %360 = vmatprep.subr.bf16.mxu0 0
        %361 = vmatpush1.bf16.xpose.msra.mxu0 0
        %362 = vmatprep.mubr.bf16.mxu0 0
        %363 = vmatmul.mubr.bf16.gmra.mrb[0].mxu0 %v325
        %v364 = vpop.f32.mrb[0].mxu0
        %v365 = vadd.f32 0.0, %v364
        %v366 = vpop.f32.mrb[0].mxu0
        %v367 = vpop.f32.mrb[0].mxu0
        %v368 = vpop.f32.mrb[0].mxu0
        %369 = vdwg.mxu0
        %v370 = vmul.f32 %v365, 0.17677669
        %vm371 = vcmask 64512
        %v372 = vsel %vm371, %v370, -inf
        %373 = vmax.xlane.f32.xlu0 %v372
        %v374 = vpop.xlane.xlu0 %373
        %v375 = vsub.f32 %v370, %v374
        %v376 = vld [vmem:[%s279] sm:$0x1]
        %vm377 = vcmp.ne.s32.totalorder %v376, 0
        %v378 = vsel %vm377, 1, 0
        %v379 = vlaneseq
        %v380 = vshrl.u32 %v379, 7
        %v381 = vsub.s32 0, %v380
        %v382 = vrot.slane %v378, %v381
        %vm383 = vcmp.eq.s32.totalorder %v382, 1
        %v384 = vsel %vm383, -inf, %v375
        %v385 = vmul.f32 %v384, 1.442695
        %v386 = vpow.pop %v385
        %v387 = vsel %vm371, %v386, 0.0
        %388 = vadd.xlane.f32.xlu0 %v387
        %v389 = vpop.xlane.xlu0 %388
        %v390 = vrcp.pop %v389
        %v391 = vmul.f32 %v386, %v390
        %v392 = vpack.c.bf16 %v391, %v391
        %v393 = vld [vmem:[%s271] sm:$0xff]
        %v394 = vpack.c.bf16 %v393, %v393
        %v396 = vsel %vm371, %v392, 0
        %vm398 = vcmask 1043456
        %v400 = vsel %vm398, %v394, 0
        %402 = vmatprep.subr.bf16.mxu0 0
        %403 = vmatpush1.bf16.msra.mxu0 %v400
        %404 = vmatprep.subr.bf16.mxu0 0
        %405 = vmatpush1.bf16.msra.mxu0 0
        %406 = vmatprep.subr.bf16.mxu0 0
        %407 = vmatpush1.bf16.msra.mxu0 0
        %408 = vmatprep.subr.bf16.mxu0 0
        %409 = vmatpush1.bf16.msra.mxu0 0
        %410 = vmatprep.subr.bf16.mxu0 0
        %411 = vmatpush1.bf16.msra.mxu0 0
        %412 = vmatprep.subr.bf16.mxu0 0
        %413 = vmatpush1.bf16.msra.mxu0 0
        %414 = vmatprep.subr.bf16.mxu0 0
        %415 = vmatpush1.bf16.msra.mxu0 0
        %416 = vmatprep.subr.bf16.mxu0 0
        %417 = vmatpush1.bf16.msra.mxu0 0
        %418 = vmatprep.subr.bf16.mxu0 0
        %419 = vmatpush1.bf16.msra.mxu0 0
        %420 = vmatprep.subr.bf16.mxu0 0
        %421 = vmatpush1.bf16.msra.mxu0 0
        %422 = vmatprep.subr.bf16.mxu0 0
        %423 = vmatpush1.bf16.msra.mxu0 0
        %424 = vmatprep.subr.bf16.mxu0 0
        %425 = vmatpush1.bf16.msra.mxu0 0
        %426 = vmatprep.subr.bf16.mxu0 0
        %427 = vmatpush1.bf16.msra.mxu0 0
        %428 = vmatprep.subr.bf16.mxu0 0
        %429 = vmatpush1.bf16.msra.mxu0 0
        %430 = vmatprep.subr.bf16.mxu0 0
        %431 = vmatpush1.bf16.msra.mxu0 0
        %432 = vmatprep.subr.bf16.mxu0 0
        %433 = vmatpush1.bf16.msra.mxu0 0
        %434 = vmatprep.mubr.bf16.mxu0 0
        %435 = vmatmul.mubr.bf16.gmra.mrb[0].mxu0 %v396
        %v436 = vpop.f32.mrb[0].mxu0
        %v437 = vadd.f32 0.0, %v436
        %v438 = vpop.f32.mrb[0].mxu0
        %v439 = vpop.f32.mrb[0].mxu0
        %v440 = vpop.f32.mrb[0].mxu0
        %441 = vdwg.mxu0
        %442 = vst.msk [vmem:[%s317] sm:$0xff] %vm323, %v437
        %s443 = sand.u32 %s139, 1
        %s444 = scalar_lea.sflag [#allocation4], %s443
        %s445 = sand.u32 %s139, 1
        %s446 = smul.addr %s445, 8
        %s447 = scalar_lea.vmem [#allocation10], %s446
        // Predicated region
        $region53: #{tpu_custom_call.1} parent=35 // pred_check
          %p448 = pneg %p149
        $region54: #{tpu_custom_call.1} parent=35 // pred_check_branch
          %450 = sbr.rel (%p448) target = $region56
        $region55: #{tpu_custom_call.1} parent=35 // pred_region
          %s452 = ssub.s32 128, 128
          %453 = vsyncadd %s444, %s452
          %s454 = smul.addr %s27, 128
          %s455 = scalar_lea.hbm %s4, %s454
          %s457 = sshll.u32 %s447, 4
          %s458 = int_to_ptr.vmem [resolvable:$true] %s457
          %460 = dma.vmem_to_hbm [thread:$0]  %s458, 128, %s455, %s444
        $region56: #{tpu_custom_call.1} parent=35 // pred_fallthru
          _
      $region36: #{tpu_custom_call.1} parent=5 // pred_fallthru
        _
      %p461 = scmp.le.s32.totalorder 2, %s22
      // Predicated region
      $region57: #{tpu_custom_call.1} parent=5 // pred_check
        %p462 = pneg %p461
      $region58: #{tpu_custom_call.1} parent=5 // pred_check_branch
        %464 = sbr.rel (%p462) target = $region60
      $region59: #{tpu_custom_call.1} parent=5 // pred_region
        %s465 = ssub.s32 %s22, 2
        // Predicated region
        $region61: #{tpu_custom_call.1} parent=59 // pred_check
          %p466 = pneg %p155
        $region62: #{tpu_custom_call.1} parent=59 // pred_check_branch
          %468 = sbr.rel (%p466) target = $region64
        $region63: #{tpu_custom_call.1} parent=59 // pred_region
          %s469 = sand.u32 %s140, 1
          %s470 = scalar_lea.sflag [#allocation4], %s469
          %s471 = sand.u32 %s140, 1
          %s472 = smul.addr %s471, 8
          %s473 = scalar_lea.vmem [#allocation10], %s472
          %474 = dma.done %s470, 128
        $region64: #{tpu_custom_call.1} parent=59 // pred_fallthru
          _
      $region60: #{tpu_custom_call.1} parent=5 // pred_fallthru
        _
    $region6: #{tpu_custom_call.1} parent=1 // loop_footer
      %s26 = sadd.s32 1, %s22
    $region7: #{tpu_custom_call.1} parent=1 // loop_footer_branch
      %21 = sbr.rel target = $region3
    $region8: #{tpu_custom_call.1} parent=1 // loop_exit
      _
    %475 = vsyncpa [#allocation3], 1
    %s476 = scalar_lea.sflag [#allocation3], 1
    %477 = vsyncpa %s476, 1
    %478 = vsyncpa [#allocation6], 1
    %s479 = scalar_lea.sflag [#allocation6], 1
    %480 = vsyncpa %s479, 1
    %481 = vsyncpa [#allocation9], 1
    %s482 = scalar_lea.sflag [#allocation9], 1
    %483 = vsyncpa %s482, 1
    %484 = vsyncpa [#allocation4], 1
    %s485 = scalar_lea.sflag [#allocation4], 1
    %486 = vsyncpa %s485, 1

</llo_original>
